<compile_context>
chip_gen: v7x
topology: tpu7x:2x2x1
jax: 0.10.0
libtpu: 0.0.40
codegen_flags: <defaults>
</compile_context>

<pallas_src>
import jax
import jax.numpy as jnp
from jax.experimental import pallas as pl
from jax.experimental.pallas import tpu as pltpu


INPUT_SIZE = 32          # self.input_size in the module (== required batch_size)
HIDDEN = 64
LATENT = 16
OUT_LANES = 128          # fused lane-dense output width: 32 + 16 + 16 + 16 + pad
DEFAULT_TILE_ROWS = 4096 # safe for v7x's 64 MiB VMEM; v5e/v6e could go larger


def _round_up(n, m):
    return ((n + m - 1) // m) * m


def vae_kernel(x_ref, wpack_ref, bpack_ref, eps_ref, out_ref):
    """One row tile: x (T,32) -> fused output (T,128) = dec|mean|logvar|z|pad."""
    x = x_ref[...]                       # (T, 32)
    w = wpack_ref[...]                   # (4, 64, 64), zero padded
    b = bpack_ref[...]                   # (4, 64),     zero padded

    # encodinglayer1: Linear(32, 64) + ReLU
    w1 = w[0, :INPUT_SIZE, :]            # (32, 64)
    h = jnp.dot(x, w1, preferred_element_type=jnp.float32) + b[0:1, :]
    h = jnp.maximum(h, 0.0)

    # encodinglayer2_mean | encodinglayer2_logvar fused into one matmul.
    # w[1] cols 0:16 = mean weights, cols 16:32 = logvar weights, cols 32:64 = 0.
    lat = jnp.dot(h, w[1], preferred_element_type=jnp.float32) + b[1:2, :]
    mean = lat[:, :LATENT]
    log_var = lat[:, LATENT:2 * LATENT]

    # sample(): z = eps * exp(0.5 * log_var) + mean   (fp32 throughout)
    std = jnp.exp(0.5 * log_var)
    z = eps_ref[...] * std + mean        # (T, 16)

    # decodinglayer: Linear(16, 64) + ReLU + Linear(64, 32) + Sigmoid
    wd1 = w[2, :LATENT, :]               # (16, 64)
    hd = jnp.dot(z, wd1, preferred_element_type=jnp.float32) + b[2:3, :]
    hd = jnp.maximum(hd, 0.0)
    dec_full = jnp.dot(hd, w[3], preferred_element_type=jnp.float32) + b[3:4, :]
    dec = jax.nn.sigmoid(dec_full[:, :INPUT_SIZE])      # (T, 32)

    # Fused lane-dense output: one unmasked 128-lane store / single writeback DMA.
    t = x.shape[0]
    pad = jnp.zeros((t, OUT_LANES - (INPUT_SIZE + 3 * LATENT)), jnp.float32)
    out_ref[...] = jnp.concatenate([dec, mean, log_var, z, pad], axis=-1)


def init_params(key, hidden=HIDDEN, latent=LATENT, input_size=INPUT_SIZE):
    ks = jax.random.split(key, 10)

    def lin(kw, kb, fan_in, fan_out):
        bound = 1.0 / jnp.sqrt(fan_in)
        w = jax.random.uniform(kw, (fan_in, fan_out), jnp.float32, -bound, bound)
        b = jax.random.uniform(kb, (1, fan_out), jnp.float32, -bound, bound)
        return w, b

    w1, b1 = lin(ks[0], ks[1], input_size, hidden)        # encodinglayer1
    wm, bm = lin(ks[2], ks[3], hidden, latent)            # encodinglayer2_mean
    wlv, blv = lin(ks[4], ks[5], hidden, latent)          # encodinglayer2_logvar
    wd1, bd1 = lin(ks[6], ks[7], latent, hidden)          # decodinglayer[0]
    wd2, bd2 = lin(ks[8], ks[9], hidden, input_size)      # decodinglayer[2]
    return dict(w1=w1, b1=b1, wm=wm, bm=bm, wlv=wlv, blv=blv,
                wd1=wd1, bd1=bd1, wd2=wd2, bd2=bd2)


def pack_params(params):
    """One-time packing of all weights/biases into two zero-padded buffers."""
    wpack = jnp.zeros((4, HIDDEN, HIDDEN), jnp.float32)
    wpack = wpack.at[0, :INPUT_SIZE, :].set(params["w1"])                  # (32,64)
    wpack = wpack.at[1, :, :2 * LATENT].set(
        jnp.concatenate([params["wm"], params["wlv"]], axis=1))            # (64,32)
    wpack = wpack.at[2, :LATENT, :].set(params["wd1"])                     # (16,64)
    wpack = wpack.at[3, :, :INPUT_SIZE].set(params["wd2"])                 # (64,32)

    bpack = jnp.zeros((4, HIDDEN), jnp.float32)
    bpack = bpack.at[0, :].set(params["b1"][0])
    bpack = bpack.at[1, :2 * LATENT].set(
        jnp.concatenate([params["bm"][0], params["blv"][0]]))
    bpack = bpack.at[2, :].set(params["bd1"][0])
    bpack = bpack.at[3, :INPUT_SIZE].set(params["bd2"][0])
    return wpack, bpack


def vae_forward(x, length, wpack, bpack, eps_key, tile_rows=None):
    """Mirrors VAE.forward(x, length). Returns (logp, mean, log_var, z)."""
    batch_size = x.shape[0]
    assert batch_size == INPUT_SIZE, "module requires batch_size == input_size (32)"
    assert (x.size % INPUT_SIZE) == 0, "batch*feat must be divisible by 32"

    # glue: sort by descending length and gather rows (plain JAX, not a kernel job)
    sorted_idx = jnp.argsort(-length)
    xs = x[sorted_idx].astype(jnp.float32).reshape(-1, batch_size)   # (rows, 32)
    rows = xs.shape[0]

    # eps ~ N(0,1) drawn outside the kernel to stay bit-identical to the JAX ref.
    # TODO(synk): optionally move RNG in-kernel (pltpu.prng_seed + stateful_normal)
    # to drop one input stream; numerics would then differ from jax.random.normal.
    eps = jax.random.normal(eps_key, (rows, LATENT), jnp.float32)

    if tile_rows is None:
        tile_rows = min(DEFAULT_TILE_ROWS, _round_up(rows, 8))
    tile_rows = max(8, _round_up(tile_rows, 8))
    padded_rows = _round_up(rows, tile_rows)
    if padded_rows != rows:
        xs = jnp.pad(xs, ((0, padded_rows - rows), (0, 0)))
        eps = jnp.pad(eps, ((0, padded_rows - rows), (0, 0)))
    num_tiles = padded_rows // tile_rows

    out = pl.pallas_call(
        vae_kernel,
        out_shape=jax.ShapeDtypeStruct((padded_rows, OUT_LANES), jnp.float32),
        grid_spec=pltpu.PrefetchScalarGridSpec(
            num_scalar_prefetch=0,
            grid=(num_tiles,),
            in_specs=[
                pl.BlockSpec((tile_rows, INPUT_SIZE), lambda i: (i, 0)),   # x tile
                pl.BlockSpec((4, HIDDEN, HIDDEN), lambda i: (0, 0, 0)),    # weights (resident)
                pl.BlockSpec((4, HIDDEN), lambda i: (0, 0)),               # biases  (resident)
                pl.BlockSpec((tile_rows, LATENT), lambda i: (i, 0)),       # eps tile
            ],
            out_specs=pl.BlockSpec((tile_rows, OUT_LANES), lambda i: (i, 0)),
        ),
        compiler_params=pltpu.CompilerParams(
            dimension_semantics=("parallel",),        # megacore sharding on v7x
            vmem_limit_bytes=32 * 1024 * 1024,
        ),
    )(xs, wpack, bpack, eps)

    out = out[:rows]
    dec = out[:, :INPUT_SIZE]
    mean = out[:, INPUT_SIZE:INPUT_SIZE + LATENT]
    log_var = out[:, INPUT_SIZE + LATENT:INPUT_SIZE + 2 * LATENT]
    z = out[:, INPUT_SIZE + 2 * LATENT:INPUT_SIZE + 3 * LATENT]

    # logp = x.view(b, s, -1)  (the log_softmax in the original is dead code)
    logp = dec.reshape(rows, INPUT_SIZE, 1)
    return logp, mean, log_var, z


def _ref_forward(x, length, params, eps_key):
    batch_size = x.shape[0]
    sorted_idx = jnp.argsort(-length)
    xs = x[sorted_idx].astype(jnp.float32).reshape(-1, batch_size)
    eps = jax.random.normal(eps_key, (xs.shape[0], params["wm"].shape[1]), jnp.float32)
    h = jnp.maximum(xs @ params["w1"] + params["b1"], 0.0)
    log_var = h @ params["wlv"] + params["blv"]
    mean = h @ params["wm"] + params["bm"]
    z = eps * jnp.exp(0.5 * log_var) + mean
    hd = jnp.maximum(z @ params["wd1"] + params["bd1"], 0.0)
    dec = jax.nn.sigmoid(hd @ params["wd2"] + params["bd2"])
    return dec.reshape(xs.shape[0], INPUT_SIZE, 1), mean, log_var, z


if __name__ == "__main__":
    key = jax.random.PRNGKey(0)
    k_param, k_x, k_len, k_eps = jax.random.split(key, 4)

    batch = 32          # forced by x.view(-1, batch_size) feeding Linear(32, H)
    feat = 16           # per-sample feature count -> rows = 32*16/32 = 16
    x = jax.random.normal(k_x, (batch, feat), jnp.float32)
    length = jax.random.randint(k_len, (batch,), 1, 20, jnp.int32)

    params = init_params(k_param)
    wpack, bpack = pack_params(params)      # one-time weight packing

    # tile_rows=8 to exercise the multi-step row grid even at this toy size.
    logp, mean, log_var, z = vae_forward(x, length, wpack, bpack, k_eps, tile_rows=8)
    jax.block_until_ready((logp, mean, log_var, z))

    # correctness check against pure-JAX reference
    r_logp, r_mean, r_lv, r_z = _ref_forward(x, length, params, k_eps)
    rows = (batch * feat) // INPUT_SIZE
    assert logp.shape == (rows, INPUT_SIZE, 1)
    assert mean.shape == (rows, LATENT) and log_var.shape == (rows, LATENT)
    assert z.shape == (rows, LATENT)
    assert jnp.allclose(logp, r_logp, atol=1e-5)
    assert jnp.allclose(mean, r_mean, atol=1e-5)
    assert jnp.allclose(log_var, r_lv, atol=1e-5)
    assert jnp.allclose(z, r_z, atol=1e-5)

    print("KERNEL_OK")
</pallas_src>

<mosaic_0001>
module attributes {stable_mosaic.version = 11 : i64} {
  func.func @vae_kernel(%arg0: i32, %arg1: memref<8x32xf32, #tpu.memory_space<vmem>>, %arg2: memref<4x64x64xf32, #tpu.memory_space<vmem>>, %arg3: memref<4x64xf32, #tpu.memory_space<vmem>>, %arg4: memref<8x16xf32, #tpu.memory_space<vmem>>, %arg5: memref<8x128xf32, #tpu.memory_space<vmem>>) attributes {dimension_semantics = [#tpu.dimension_semantics<parallel>], iteration_bounds = array<i64: 2>, scalar_prefetch = 0 : i64, scratch_operands = 0 : i64, tpu.core_type = #tpu.core_type<tc>, window_params = [{transform_indices = @transform_0, window_bounds = array<i64: 8, 32>}, {pipeline_mode = #tpu.pipeline_mode<synchronous>, transform_indices = @transform_1, window_bounds = array<i64: 4, 64, 64>}, {pipeline_mode = #tpu.pipeline_mode<synchronous>, transform_indices = @transform_2, window_bounds = array<i64: 4, 64>}, {transform_indices = @transform_3, window_bounds = array<i64: 8, 16>}, {transform_indices = @transform_4, window_bounds = array<i64: 8, 128>}]} {
    %c0 = arith.constant 0 : index
    %c0_0 = arith.constant 0 : index
    %0 = vector.load %arg1[%c0, %c0_0] : memref<8x32xf32, #tpu.memory_space<vmem>>, vector<8x32xf32>
    %c0_1 = arith.constant 0 : index
    %c0_2 = arith.constant 0 : index
    %c0_3 = arith.constant 0 : index
    %1 = vector.load %arg2[%c0_1, %c0_2, %c0_3] : memref<4x64x64xf32, #tpu.memory_space<vmem>>, vector<4x64x64xf32>
    %c0_4 = arith.constant 0 : index
    %c0_5 = arith.constant 0 : index
    %2 = vector.load %arg3[%c0_4, %c0_5] : memref<4x64xf32, #tpu.memory_space<vmem>>, vector<4x64xf32>
    %3 = vector.extract_strided_slice %1 {offsets = [0, 0, 0], sizes = [1, 32, 64], strides = [1, 1, 1]} : vector<4x64x64xf32> to vector<1x32x64xf32>
    %4 = vector.shape_cast %3 : vector<1x32x64xf32> to vector<32x64xf32>
    %cst = arith.constant dense<0.000000e+00> : vector<8x64xf32>
    %5 = tpu.matmul %0, %4, %cst {dimension_numbers = #tpu.dot_dimension_numbers<[1], [0], [0], [1], [0, 0, 1, 1], [], []>} : vector<8x32xf32>, vector<32x64xf32>, vector<8x64xf32> -> vector<8x64xf32>
    %6 = vector.extract_strided_slice %2 {offsets = [0, 0], sizes = [1, 64], strides = [1, 1]} : vector<4x64xf32> to vector<1x64xf32>
    %7 = vector.broadcast %6 : vector<1x64xf32> to vector<8x64xf32>
    %8 = arith.addf %5, %7 : vector<8x64xf32>
    %cst_6 = arith.constant 0.000000e+00 : f32
    %9 = vector.broadcast %cst_6 : f32 to vector<8x64xf32>
    %10 = arith.maximumf %8, %9 : vector<8x64xf32>
    %11 = vector.extract_strided_slice %1 {offsets = [1, 0, 0], sizes = [1, 64, 64], strides = [1, 1, 1]} : vector<4x64x64xf32> to vector<1x64x64xf32>
    %12 = vector.shape_cast %11 : vector<1x64x64xf32> to vector<64x64xf32>
    %cst_7 = arith.constant dense<0.000000e+00> : vector<8x64xf32>
    %13 = tpu.matmul %10, %12, %cst_7 {dimension_numbers = #tpu.dot_dimension_numbers<[1], [0], [0], [1], [0, 0, 1, 1], [], []>} : vector<8x64xf32>, vector<64x64xf32>, vector<8x64xf32> -> vector<8x64xf32>
    %14 = vector.extract_strided_slice %2 {offsets = [1, 0], sizes = [1, 64], strides = [1, 1]} : vector<4x64xf32> to vector<1x64xf32>
    %15 = vector.broadcast %14 : vector<1x64xf32> to vector<8x64xf32>
    %16 = arith.addf %13, %15 : vector<8x64xf32>
    %17 = vector.extract_strided_slice %16 {offsets = [0, 0], sizes = [8, 16], strides = [1, 1]} : vector<8x64xf32> to vector<8x16xf32>
    %18 = vector.extract_strided_slice %16 {offsets = [0, 16], sizes = [8, 16], strides = [1, 1]} : vector<8x64xf32> to vector<8x16xf32>
    %cst_8 = arith.constant 5.000000e-01 : f32
    %19 = vector.broadcast %cst_8 : f32 to vector<8x16xf32>
    %20 = arith.mulf %19, %18 : vector<8x16xf32>
    %21 = math.exp %20 : vector<8x16xf32>
    %c0_9 = arith.constant 0 : index
    %c0_10 = arith.constant 0 : index
    %22 = vector.load %arg4[%c0_9, %c0_10] : memref<8x16xf32, #tpu.memory_space<vmem>>, vector<8x16xf32>
    %23 = arith.mulf %22, %21 : vector<8x16xf32>
    %24 = arith.addf %23, %17 : vector<8x16xf32>
    %25 = vector.extract_strided_slice %1 {offsets = [2, 0, 0], sizes = [1, 16, 64], strides = [1, 1, 1]} : vector<4x64x64xf32> to vector<1x16x64xf32>
    %26 = vector.shape_cast %25 : vector<1x16x64xf32> to vector<16x64xf32>
    %cst_11 = arith.constant dense<0.000000e+00> : vector<8x64xf32>
    %27 = tpu.matmul %24, %26, %cst_11 {dimension_numbers = #tpu.dot_dimension_numbers<[1], [0], [0], [1], [0, 0, 1, 1], [], []>} : vector<8x16xf32>, vector<16x64xf32>, vector<8x64xf32> -> vector<8x64xf32>
    %28 = vector.extract_strided_slice %2 {offsets = [2, 0], sizes = [1, 64], strides = [1, 1]} : vector<4x64xf32> to vector<1x64xf32>
    %29 = vector.broadcast %28 : vector<1x64xf32> to vector<8x64xf32>
    %30 = arith.addf %27, %29 : vector<8x64xf32>
    %cst_12 = arith.constant 0.000000e+00 : f32
    %31 = vector.broadcast %cst_12 : f32 to vector<8x64xf32>
    %32 = arith.maximumf %30, %31 : vector<8x64xf32>
    %33 = vector.extract_strided_slice %1 {offsets = [3, 0, 0], sizes = [1, 64, 64], strides = [1, 1, 1]} : vector<4x64x64xf32> to vector<1x64x64xf32>
    %34 = vector.shape_cast %33 : vector<1x64x64xf32> to vector<64x64xf32>
    %cst_13 = arith.constant dense<0.000000e+00> : vector<8x64xf32>
    %35 = tpu.matmul %32, %34, %cst_13 {dimension_numbers = #tpu.dot_dimension_numbers<[1], [0], [0], [1], [0, 0, 1, 1], [], []>} : vector<8x64xf32>, vector<64x64xf32>, vector<8x64xf32> -> vector<8x64xf32>
    %36 = vector.extract_strided_slice %2 {offsets = [3, 0], sizes = [1, 64], strides = [1, 1]} : vector<4x64xf32> to vector<1x64xf32>
    %37 = vector.broadcast %36 : vector<1x64xf32> to vector<8x64xf32>
    %38 = arith.addf %35, %37 : vector<8x64xf32>
    %39 = vector.extract_strided_slice %38 {offsets = [0, 0], sizes = [8, 32], strides = [1, 1]} : vector<8x64xf32> to vector<8x32xf32>
    %40 = arith.negf %39 : vector<8x32xf32>
    %41 = math.exp %40 : vector<8x32xf32>
    %cst_14 = arith.constant 1.000000e+00 : f32
    %42 = vector.broadcast %cst_14 : f32 to vector<8x32xf32>
    %43 = arith.addf %42, %41 : vector<8x32xf32>
    %44 = arith.divf %42, %43 : vector<8x32xf32>
    %cst_15 = arith.constant 0.000000e+00 : f32
    %45 = vector.broadcast %cst_15 : f32 to vector<8x48xf32>
    %46 = tpu.concatenate %44, %17, %18, %24, %45 in 1 : vector<8x32xf32>, vector<8x16xf32>, vector<8x16xf32>, vector<8x16xf32>, vector<8x48xf32> -> vector<8x128xf32>
    %c0_16 = arith.constant 0 : index
    %c0_17 = arith.constant 0 : index
    %47 = vector.load %arg5[%c0_16, %c0_17] : memref<8x128xf32, #tpu.memory_space<vmem>>, vector<8x128xf32>
    tpu.vector_store %arg5[%c0_16, %c0_17], %46 {strides = array<i32>} : memref<8x128xf32, #tpu.memory_space<vmem>>, vector<8x128xf32>,
    return
  }
  func.func @transform_0(%arg0: i32) -> (i32, i32) {
    %c0_i32 = arith.constant 0 : i32
    %c0_i32_0 = arith.constant 0 : i32
    return %arg0, %c0_i32 : i32, i32
  }
  func.func @transform_1(%arg0: i32) -> (i32, i32, i32) {
    %c0_i32 = arith.constant 0 : i32
    %c0_i32_0 = arith.constant 0 : i32
    %c0_i32_1 = arith.constant 0 : i32
    %c0_i32_2 = arith.constant 0 : i32
    return %c0_i32, %c0_i32_0, %c0_i32_1 : i32, i32, i32
  }
  func.func @transform_2(%arg0: i32) -> (i32, i32) {
    %c0_i32 = arith.constant 0 : i32
    %c0_i32_0 = arith.constant 0 : i32
    %c0_i32_1 = arith.constant 0 : i32
    return %c0_i32, %c0_i32_0 : i32, i32
  }
  func.func @transform_3(%arg0: i32) -> (i32, i32) {
    %c0_i32 = arith.constant 0 : i32
    %c0_i32_0 = arith.constant 0 : i32
    return %arg0, %c0_i32 : i32, i32
  }
  func.func @transform_4(%arg0: i32) -> (i32, i32) {
    %c0_i32 = arith.constant 0 : i32
    %c0_i32_0 = arith.constant 0 : i32
    return %arg0, %c0_i32 : i32, i32
  }
}

</mosaic_0001>

<llo_original>
// kernel: tpu_custom_call.1
$region0: #{tpu_custom_call.1}
  #allocation0 [shape = 'u32[]', space=smem, size = 0x4, offset = 0x4, fixed_abs, tag = 'smem constant byte address 0x4 - core index']
  #allocation1 [shape = 'u32[144,128]{1,0:T(1,128)}', space=vmem, size = 0x12000, scoped, tag = 'internal scratch']
  %s0 = inlined_call_operand.hbm [shape: f32[16,32], index: 0, kind: input, shape index: {}]
  %s1 = inlined_call_operand.hbm [shape: f32[4,64,64], index: 1, kind: input, shape index: {}]
  %s2 = inlined_call_operand.vmem [shape: f32[4,64], index: 2, kind: input, shape index: {}]
  %s3 = inlined_call_operand.hbm [shape: f32[16,16], index: 3, kind: input, shape index: {}]
  %s4 = inlined_call_operand.hbm [shape: f32[16,128], index: 4, kind: output, shape index: {}]
  %s5 = sld [smem:[#allocation0]]
  $region61: #{tpu_custom_call.1} parent=0
    _
  %s7 = ssub.s32 1, %s5
  %s8 = scalar_select 0, %s7, %s5
  $region1: #{tpu_custom_call.1} parent=0
    #allocation2 [shape = 'u8[8192]{0}', space=vmem, size = 0x2000, scoped, tag = 'input window, operand 0']
    #allocation3 [shape = 's32[2]{0}', space=sflag, size = 0x8, scoped, tag = 'scoped memory for tpu_custom_call.1']
    #allocation4 [shape = 's32[2]{0}', space=sflag, size = 0x8, scoped, tag = 'scoped memory for tpu_custom_call.1']
    #allocation5 [shape = 'u8[131072]{0}', space=vmem, size = 0x20000, scoped, tag = 'input window, operand 1, single buffered']
    #allocation6 [shape = 's32[1]{0}', space=sflag, size = 0x4, scoped, tag = 'scoped memory for tpu_custom_call.1']
    #allocation7 [shape = 'u8[8192]{0}', space=vmem, size = 0x2000, scoped, tag = 'input window, operand 3']
    #allocation8 [shape = 'u8[8192]{0}', space=vmem, size = 0x2000, scoped, tag = 'output window, operand 0']
    %9 = vsyncpa [#allocation3], 0
    %s10 = scalar_lea.sflag [#allocation3], 1
    %11 = vsyncpa %s10, 0
    %12 = vsyncpa [#allocation6], 0
    %13 = vsyncpa [#allocation4], 0
    %s14 = scalar_lea.sflag [#allocation4], 1
    %15 = vsyncpa %s14, 0
    loop: start=0, step=1, limit=4
    $region2: #{tpu_custom_call.1} parent=1 // loop_pre_header
      _
    $region3: #{tpu_custom_call.1} parent=1 // loop_header
      %s17 = sphi 0, %s21
      %p18 = scmp.ge.s32.totalorder %s17, 4
      %s27 = sphi 0, %s29
      %s30 = sphi 0, %s27
      %s31 = sphi 0, %s30
      %s47 = sphi 0, %s31
      %s51 = sphi 0, %s51
      %s53 = sphi 0, %s51
      %s54 = sphi 0, %s53
      %s68 = sphi 0, %s54
      %s72 = sphi 0, %s72
      %s74 = sphi 0, %s72
      %s75 = sphi 0, %s74
      %s89 = sphi 0, %s75
      %s95 = sphi 0, %s97
      %s98 = sphi 0, %s95
      %s99 = sphi 0, %s98
      %s115 = sphi 0, %s99
      %s121 = sphi 0, %s123
      %s124 = sphi 0, %s121
      %s125 = sphi 0, %s124
      %s141 = sphi 0, %s125
    $region4: #{tpu_custom_call.1} parent=1 // loop_header_branch
      %20 = sbr.rel (%p18) target = $region8
    $region5: #{tpu_custom_call.1} parent=1 // loop_body
      %s22 = ssub.s32 %s17, 1
      %s23 = ssub.s32 %s17, 2
      %s24 = sadd.s32 %s17, 1
      %s25 = ssub.s32 %s17, %s24
      %p26 = scmp.eq.s32.totalorder %s25, 0
      %s28 = sadd.s32 %s27, 1
      %s29 = scalar_select %p26, %s27, %s28
      %p32 = pneg %p26
      %p33 = scmp.eq.s32.totalorder %s17, 1
      %p34 = por %p32, %p33
      %p35 = scmp.ne.s32.totalorder %s27, %s30
      %p36 = scmp.eq.s32.totalorder %s17, 0
      %p37 = por %p35, %p36
      %p38 = scmp.ne.s32.totalorder %s27, %s30
      %p39 = scmp.eq.s32.totalorder %s22, 1
      %p40 = por %p38, %p39
      %p41 = scmp.ne.s32.totalorder %s30, %s31
      %p42 = scmp.eq.s32.totalorder %s22, 0
      %p43 = por %p41, %p42
      %p44 = scmp.ne.s32.totalorder %s30, %s31
      %p45 = scmp.eq.s32.totalorder %s23, 1
      %p46 = por %p44, %p45
      %p48 = scmp.ne.s32.totalorder %s31, %s47
      %p49 = scmp.eq.s32.totalorder %s23, 0
      %p50 = por %p48, %p49
      %s52 = sadd.s32 %s51, 1
      %p55 = scmp.eq.s32.totalorder %s17, 1
      %p56 = scmp.ne.s32.totalorder %s51, %s53
      %p57 = scmp.eq.s32.totalorder %s17, 0
      %p58 = por %p56, %p57
      %p59 = scmp.ne.s32.totalorder %s51, %s53
      %p60 = scmp.eq.s32.totalorder %s22, 1
      %p61 = por %p59, %p60
      %p62 = scmp.ne.s32.totalorder %s53, %s54
      %p63 = scmp.eq.s32.totalorder %s22, 0
      %p64 = por %p62, %p63
      %p65 = scmp.ne.s32.totalorder %s53, %s54
      %p66 = scmp.eq.s32.totalorder %s23, 1
      %p67 = por %p65, %p66
      %p69 = scmp.ne.s32.totalorder %s54, %s68
      %p70 = scmp.eq.s32.totalorder %s23, 0
      %p71 = por %p69, %p70
      %s73 = sadd.s32 %s72, 1
      %p76 = scmp.eq.s32.totalorder %s17, 1
      %p77 = scmp.ne.s32.totalorder %s72, %s74
      %p78 = scmp.eq.s32.totalorder %s17, 0
      %p79 = por %p77, %p78
      %p80 = scmp.ne.s32.totalorder %s72, %s74
      %p81 = scmp.eq.s32.totalorder %s22, 1
      %p82 = por %p80, %p81
      %p83 = scmp.ne.s32.totalorder %s74, %s75
      %p84 = scmp.eq.s32.totalorder %s22, 0
      %p85 = por %p83, %p84
      %p86 = scmp.ne.s32.totalorder %s74, %s75
      %p87 = scmp.eq.s32.totalorder %s23, 1
      %p88 = por %p86, %p87
      %p90 = scmp.ne.s32.totalorder %s75, %s89
      %p91 = scmp.eq.s32.totalorder %s23, 0
      %p92 = por %p90, %p91
      %s93 = ssub.s32 %s17, %s24
      %p94 = scmp.eq.s32.totalorder %s93, 0
      %s96 = sadd.s32 %s95, 1
      %s97 = scalar_select %p94, %s95, %s96
      %p100 = pneg %p94
      %p101 = scmp.eq.s32.totalorder %s17, 1
      %p102 = por %p100, %p101
      %p103 = scmp.ne.s32.totalorder %s95, %s98
      %p104 = scmp.eq.s32.totalorder %s17, 0
      %p105 = por %p103, %p104
      %p106 = scmp.ne.s32.totalorder %s95, %s98
      %p107 = scmp.eq.s32.totalorder %s22, 1
      %p108 = por %p106, %p107
      %p109 = scmp.ne.s32.totalorder %s98, %s99
      %p110 = scmp.eq.s32.totalorder %s22, 0
      %p111 = por %p109, %p110
      %p112 = scmp.ne.s32.totalorder %s98, %s99
      %p113 = scmp.eq.s32.totalorder %s23, 1
      %p114 = por %p112, %p113
      %p116 = scmp.ne.s32.totalorder %s99, %s115
      %p117 = scmp.eq.s32.totalorder %s23, 0
      %p118 = por %p116, %p117
      %s119 = ssub.s32 %s17, %s24
      %p120 = scmp.eq.s32.totalorder %s119, 0
      %s122 = sadd.s32 %s121, 1
      %s123 = scalar_select %p120, %s121, %s122
      %p126 = pneg %p120
      %p127 = scmp.eq.s32.totalorder %s17, 1
      %p128 = por %p126, %p127
      %p129 = scmp.ne.s32.totalorder %s121, %s124
      %p130 = scmp.eq.s32.totalorder %s17, 0
      %p131 = por %p129, %p130
      %p132 = scmp.ne.s32.totalorder %s121, %s124
      %p133 = scmp.eq.s32.totalorder %s22, 1
      %p134 = por %p132, %p133
      %p135 = scmp.ne.s32.totalorder %s124, %s125
      %p136 = scmp.eq.s32.totalorder %s22, 0
      %p137 = por %p135, %p136
      %p138 = scmp.ne.s32.totalorder %s124, %s125
      %p139 = scmp.eq.s32.totalorder %s23, 1
      %p140 = por %p138, %p139
      %p142 = scmp.ne.s32.totalorder %s125, %s141
      %p143 = scmp.eq.s32.totalorder %s23, 0
      %p144 = por %p142, %p143
      %p145 = scmp.le.s32.totalorder 1, %s17
      %p146 = scmp.lt.s32.totalorder %s17, 3
      %p147 = pnand %p145, %p146
      %p148 = pneg %p147
      // Predicated region
      $region9: #{tpu_custom_call.1} parent=5 // pred_check
        _
      $region10: #{tpu_custom_call.1} parent=5 // pred_check_branch
        %150 = sbr.rel (%p147) target = $region12
      $region11: #{tpu_custom_call.1} parent=5 // pred_region
        %s151 = ssub.s32 %s17, 1
        // Predicated region
        $region13: #{tpu_custom_call.1} parent=11 // pred_check
          %p152 = pneg %p64
        $region14: #{tpu_custom_call.1} parent=11 // pred_check_branch
          %154 = sbr.rel (%p152) target = $region16
        $region15: #{tpu_custom_call.1} parent=11 // pred_region
          %s156 = ssub.s32 4096, 4096
          %157 = vsyncadd [#allocation6], %s156
          %s158 = sshll.u32 [#allocation5], 4
          %s159 = int_to_ptr.vmem [resolvable:$true] %s158
          %164 = dma.hbm_to_vmem [thread:$0]  %s1, 4096, %s159, [#allocation6], 128, 128, 8
        $region16: #{tpu_custom_call.1} parent=11 // pred_fallthru
          _
        // Predicated region
        $region17: #{tpu_custom_call.1} parent=11 // pred_check
          %p165 = pneg %p85
        $region18: #{tpu_custom_call.1} parent=11 // pred_check_branch
          %167 = sbr.rel (%p165) target = $region20
        $region19: #{tpu_custom_call.1} parent=11 // pred_region
          _
        $region20: #{tpu_custom_call.1} parent=11 // pred_fallthru
          _
      $region12: #{tpu_custom_call.1} parent=5 // pred_fallthru
        _
      %p168 = scmp.lt.s32.totalorder %s17, 2
      // Predicated region
      $region21: #{tpu_custom_call.1} parent=5 // pred_check
        %p169 = pneg %p168
      $region22: #{tpu_custom_call.1} parent=5 // pred_check_branch
        %171 = sbr.rel (%p169) target = $region24
      $region23: #{tpu_custom_call.1} parent=5 // pred_region
        // Predicated region
        $region25: #{tpu_custom_call.1} parent=23 // pred_check
          %p172 = pneg %p37
        $region26: #{tpu_custom_call.1} parent=23 // pred_check_branch
          %174 = sbr.rel (%p172) target = $region28
        $region27: #{tpu_custom_call.1} parent=23 // pred_region
          %s175 = sand.u32 %s17, 1
          %s176 = scalar_lea.sflag [#allocation3], %s175
          %s177 = sand.u32 %s27, 1
          %s178 = smul.addr %s177, 8
          %s179 = scalar_lea.vmem [#allocation2], %s178
          %s181 = ssub.s32 128, 128
          %182 = vsyncadd %s176, %s181
          %s183 = smul.addr %s17, 128
          %s184 = scalar_lea.hbm %s0, %s183
          %s186 = sshll.u32 %s179, 4
          %s187 = int_to_ptr.vmem [resolvable:$true] %s186
          %189 = dma.hbm_to_vmem [thread:$0]  %s184, 128, %s187, %s176
        $region28: #{tpu_custom_call.1} parent=23 // pred_fallthru
          _
        // Predicated region
        $region29: #{tpu_custom_call.1} parent=23 // pred_check
          %p190 = pneg %p105
        $region30: #{tpu_custom_call.1} parent=23 // pred_check_branch
          %192 = sbr.rel (%p190) target = $region32
        $region31: #{tpu_custom_call.1} parent=23 // pred_region
          %s193 = sand.u32 %s17, 1
          %s194 = scalar_lea.sflag [#allocation3], %s193
          %s195 = sand.u32 %s95, 1
          %s196 = smul.addr %s195, 8
          %s197 = scalar_lea.vmem [#allocation7], %s196
          %s199 = ssub.s32 128, 128
          %200 = vsyncadd %s194, %s199
          %s201 = smul.addr %s17, 128
          %s202 = scalar_lea.hbm %s3, %s201
          %s204 = sshll.u32 %s197, 4
          %s205 = int_to_ptr.vmem [resolvable:$true] %s204
          %207 = dma.hbm_to_vmem [thread:$0]  %s202, 128, %s205, %s194
        $region32: #{tpu_custom_call.1} parent=23 // pred_fallthru
          _
      $region24: #{tpu_custom_call.1} parent=5 // pred_fallthru
        _
      %p208 = scmp.le.s32.totalorder 1, %s17
      %p209 = scmp.lt.s32.totalorder %s17, 3
      %p210 = pnand %p208, %p209
      %p211 = pneg %p210
      // Predicated region
      $region33: #{tpu_custom_call.1} parent=5 // pred_check
        _
      $region34: #{tpu_custom_call.1} parent=5 // pred_check_branch
        %213 = sbr.rel (%p210) target = $region36
      $region35: #{tpu_custom_call.1} parent=5 // pred_region
        %s214 = ssub.s32 %s17, 1
        %s215 = sand.u32 %s22, 1
        %s216 = scalar_lea.sflag [#allocation3], %s215
        %s217 = sand.u32 %s30, 1
        %s218 = smul.addr %s217, 8
        %s219 = scalar_lea.vmem [#allocation2], %s218
        // Predicated region
        $region37: #{tpu_custom_call.1} parent=35 // pred_check
          %p220 = pneg %p43
        $region38: #{tpu_custom_call.1} parent=35 // pred_check_branch
          %222 = sbr.rel (%p220) target = $region40
        $region39: #{tpu_custom_call.1} parent=35 // pred_region
          %223 = dma.done %s216, 128
        $region40: #{tpu_custom_call.1} parent=35 // pred_fallthru
          _
        // Predicated region
        $region41: #{tpu_custom_call.1} parent=35 // pred_check
          %p224 = pneg %p64
        $region42: #{tpu_custom_call.1} parent=35 // pred_check_branch
          %226 = sbr.rel (%p224) target = $region44
        $region43: #{tpu_custom_call.1} parent=35 // pred_region
          %227 = dma.done [#allocation6], 4096
        $region44: #{tpu_custom_call.1} parent=35 // pred_fallthru
          _
        %s228 = sand.u32 %s22, 1
        %s229 = scalar_lea.sflag [#allocation3], %s228
        %s230 = sand.u32 %s98, 1
        %s231 = smul.addr %s230, 8
        %s232 = scalar_lea.vmem [#allocation7], %s231
        // Predicated region
        $region45: #{tpu_custom_call.1} parent=35 // pred_check
          %p233 = pneg %p111
        $region46: #{tpu_custom_call.1} parent=35 // pred_check_branch
          %235 = sbr.rel (%p233) target = $region48
        $region47: #{tpu_custom_call.1} parent=35 // pred_region
          %236 = dma.done %s229, 128
        $region48: #{tpu_custom_call.1} parent=35 // pred_fallthru
          _
        %s237 = sand.u32 %s22, 1
        %s238 = scalar_lea.sflag [#allocation3], %s237
        %s239 = sand.u32 %s30, 1
        %s240 = smul.addr %s239, 8
        %s241 = scalar_lea.vmem [#allocation2], %s240
        %p242 = pneg %p43
        %p243 = pneg %p40
        %p244 = pneg %p64
        %p245 = pneg %p61
        %p246 = pneg %p85
        %p247 = pneg %p82
        %s248 = sand.u32 %s22, 1
        %s249 = scalar_lea.sflag [#allocation3], %s248
        %s250 = sand.u32 %s98, 1
        %s251 = smul.addr %s250, 8
        %s252 = scalar_lea.vmem [#allocation7], %s251
        %p253 = pneg %p111
        %p254 = pneg %p108
        %p255 = pneg %p137
        %p256 = pneg %p134
        %s257 = sand.u32 %s124, 1
        %s258 = scalar_lea.sflag [#allocation4], %s257
        %s259 = sand.u32 %s124, 1
        %s260 = smul.addr %s259, 8
        %s261 = scalar_lea.vmem [#allocation8], %s260
        %v262 = vld [vmem:[%s219] sm:$0xff]
        %v263 = vld [vmem:[#allocation5] sm:$0xff]
        %v264 = vld [vmem:[#allocation5 + $0x8] sm:$0xff]
        %v265 = vld [vmem:[#allocation5 + $0x10] sm:$0xff]
        %v266 = vld [vmem:[#allocation5 + $0x18] sm:$0xff]
        %v267 = vld [vmem:[#allocation5 + $0x40] sm:$0xff]
        %v268 = vld [vmem:[#allocation5 + $0x48] sm:$0xff]
        %v269 = vld [vmem:[#allocation5 + $0x50] sm:$0xff]
        %v270 = vld [vmem:[#allocation5 + $0x58] sm:$0xff]
        %v271 = vld [vmem:[#allocation5 + $0x60] sm:$0xff]
        %v272 = vld [vmem:[#allocation5 + $0x68] sm:$0xff]
        %v273 = vld [vmem:[#allocation5 + $0x70] sm:$0xff]
        %v274 = vld [vmem:[#allocation5 + $0x78] sm:$0xff]
        %v275 = vld [vmem:[#allocation5 + $0x80] sm:$0xff]
        %v276 = vld [vmem:[#allocation5 + $0x88] sm:$0xff]
        %v277 = vld [vmem:[#allocation5 + $0xc0] sm:$0xff]
        %v278 = vld [vmem:[#allocation5 + $0xc8] sm:$0xff]
        %v279 = vld [vmem:[#allocation5 + $0xd0] sm:$0xff]
        %v280 = vld [vmem:[#allocation5 + $0xd8] sm:$0xff]
        %v281 = vld [vmem:[#allocation5 + $0xe0] sm:$0xff]
        %v282 = vld [vmem:[#allocation5 + $0xe8] sm:$0xff]
        %v283 = vld [vmem:[#allocation5 + $0xf0] sm:$0xff]
        %v284 = vld [vmem:[#allocation5 + $0xf8] sm:$0xff]
        %v285 = vld [vmem:[%s2] sm:$0xf]
        %v286 = vlaneseq
        %v287 = vshrl.u32 %v286, 7
        %v288 = vsub.s32 0, %v287
        %v289 = vrot.slane %v285, %v288
        %vm290 = vcmask 261120
        %v292 = vsel %vm290, %v262, 0
        %294 = vmatprep.subr.mxu0 0.0
        %295 = vmatpush1.msra.mxu0 %v263
        %296 = vmatprep.subr.mxu0 0.0
        %297 = vmatpush1.msra.mxu0 %v264
        %298 = vmatprep.subr.mxu0 0.0
        %299 = vmatpush1.msra.mxu0 %v265
        %300 = vmatprep.subr.mxu0 0.0
        %301 = vmatpush1.msra.mxu0 %v266
        %302 = vmatprep.subr.mxu0 0.0
        %303 = vmatpush1.msra.mxu0 0.0
        %304 = vmatprep.subr.mxu0 0.0
        %305 = vmatpush1.msra.mxu0 0.0
        %306 = vmatprep.subr.mxu0 0.0
        %307 = vmatpush1.msra.mxu0 0.0
        %308 = vmatprep.subr.mxu0 0.0
        %309 = vmatpush1.msra.mxu0 0.0
        %310 = vmatprep.subr.mxu0 0.0
        %311 = vmatpush1.msra.mxu0 0.0
        %312 = vmatprep.subr.mxu0 0.0
        %313 = vmatpush1.msra.mxu0 0.0
        %314 = vmatprep.subr.mxu0 0.0
        %315 = vmatpush1.msra.mxu0 0.0
        %316 = vmatprep.subr.mxu0 0.0
        %317 = vmatpush1.msra.mxu0 0.0
        %318 = vmatprep.subr.mxu0 0.0
        %319 = vmatpush1.msra.mxu0 0.0
        %320 = vmatprep.subr.mxu0 0.0
        %321 = vmatpush1.msra.mxu0 0.0
        %322 = vmatprep.subr.mxu0 0.0
        %323 = vmatpush1.msra.mxu0 0.0
        %324 = vmatprep.subr.mxu0 0.0
        %325 = vmatpush1.msra.mxu0 0.0
        %326 = vmatprep.subr.mxu0 0.0
        %327 = vmatpush1.msra.mxu0 0.0
        %328 = vmatprep.subr.mxu0 0.0
        %329 = vmatpush1.msra.mxu0 0.0
        %330 = vmatprep.subr.mxu0 0.0
        %331 = vmatpush1.msra.mxu0 0.0
        %332 = vmatprep.subr.mxu0 0.0
        %333 = vmatpush1.msra.mxu0 0.0
        %334 = vmatprep.subr.mxu0 0.0
        %335 = vmatpush1.msra.mxu0 0.0
        %336 = vmatprep.subr.mxu0 0.0
        %337 = vmatpush1.msra.mxu0 0.0
        %338 = vmatprep.subr.mxu0 0.0
        %339 = vmatpush1.msra.mxu0 0.0
        %340 = vmatprep.subr.mxu0 0.0
        %341 = vmatpush1.msra.mxu0 0.0
        %342 = vmatprep.subr.mxu0 0.0
        %343 = vmatpush1.msra.mxu0 0.0
        %344 = vmatprep.subr.mxu0 0.0
        %345 = vmatpush1.msra.mxu0 0.0
        %346 = vmatprep.subr.mxu0 0.0
        %347 = vmatpush1.msra.mxu0 0.0
        %348 = vmatprep.subr.mxu0 0.0
        %349 = vmatpush1.msra.mxu0 0.0
        %350 = vmatprep.subr.mxu0 0.0
        %351 = vmatpush1.msra.mxu0 0.0
        %352 = vmatprep.subr.mxu0 0.0
        %353 = vmatpush1.msra.mxu0 0.0
        %354 = vmatprep.subr.mxu0 0.0
        %355 = vmatpush1.msra.mxu0 0.0
        %356 = vmatprep.subr.mxu0 0.0
        %357 = vmatpush1.msra.mxu0 0.0
        %358 = vmatprep.mubr.f32.mxu0 0.0
        %359 = vmatmul.mubr.f32.gmra.mrb[0].mxu0 %v292
        %v360 = vpop.f32.mrb[0].mxu0
        %v361 = vadd.f32 %v289, %v360
        %v362 = vpop.f32.mrb[0].mxu0
        %363 = vdwg.mxu0
        %v364 = vmax.f32 %v361, 0.0
        %v365 = vlaneseq
        %v366 = vshrl.u32 %v365, 7
        %v367 = vsub.s32 1, %v366
        %v368 = vrot.slane %v285, %v367
        %vm369 = vcmask 523264
        %v371 = vsel %vm369, %v364, 0
        %373 = vmatprep.subr.mxu0 0.0
        %374 = vmatpush1.msra.mxu0 %v267
        %375 = vmatprep.subr.mxu0 0.0
        %376 = vmatpush1.msra.mxu0 %v268
        %377 = vmatprep.subr.mxu0 0.0
        %378 = vmatpush1.msra.mxu0 %v269
        %379 = vmatprep.subr.mxu0 0.0
        %380 = vmatpush1.msra.mxu0 %v270
        %381 = vmatprep.subr.mxu0 0.0
        %382 = vmatpush1.msra.mxu0 %v271
        %383 = vmatprep.subr.mxu0 0.0
        %384 = vmatpush1.msra.mxu0 %v272
        %385 = vmatprep.subr.mxu0 0.0
        %386 = vmatpush1.msra.mxu0 %v273
        %387 = vmatprep.subr.mxu0 0.0
        %388 = vmatpush1.msra.mxu0 %v274
        %389 = vmatprep.subr.mxu0 0.0
        %390 = vmatpush1.msra.mxu0 0.0
        %391 = vmatprep.subr.mxu0 0.0
        %392 = vmatpush1.msra.mxu0 0.0
        %393 = vmatprep.subr.mxu0 0.0
        %394 = vmatpush1.msra.mxu0 0.0
        %395 = vmatprep.subr.mxu0 0.0
        %396 = vmatpush1.msra.mxu0 0.0
        %397 = vmatprep.subr.mxu0 0.0
        %398 = vmatpush1.msra.mxu0 0.0
        %399 = vmatprep.subr.mxu0 0.0
        %400 = vmatpush1.msra.mxu0 0.0
        %401 = vmatprep.subr.mxu0 0.0
        %402 = vmatpush1.msra.mxu0 0.0
        %403 = vmatprep.subr.mxu0 0.0
        %404 = vmatpush1.msra.mxu0 0.0
        %405 = vmatprep.subr.mxu0 0.0
        %406 = vmatpush1.msra.mxu0 0.0
        %407 = vmatprep.subr.mxu0 0.0
        %408 = vmatpush1.msra.mxu0 0.0
        %409 = vmatprep.subr.mxu0 0.0
        %410 = vmatpush1.msra.mxu0 0.0
        %411 = vmatprep.subr.mxu0 0.0
        %412 = vmatpush1.msra.mxu0 0.0
        %413 = vmatprep.subr.mxu0 0.0
        %414 = vmatpush1.msra.mxu0 0.0
        %415 = vmatprep.subr.mxu0 0.0
        %416 = vmatpush1.msra.mxu0 0.0
        %417 = vmatprep.subr.mxu0 0.0
        %418 = vmatpush1.msra.mxu0 0.0
        %419 = vmatprep.subr.mxu0 0.0
        %420 = vmatpush1.msra.mxu0 0.0
        %421 = vmatprep.subr.mxu0 0.0
        %422 = vmatpush1.msra.mxu0 0.0
        %423 = vmatprep.subr.mxu0 0.0
        %424 = vmatpush1.msra.mxu0 0.0
        %425 = vmatprep.subr.mxu0 0.0
        %426 = vmatpush1.msra.mxu0 0.0
        %427 = vmatprep.subr.mxu0 0.0
        %428 = vmatpush1.msra.mxu0 0.0
        %429 = vmatprep.subr.mxu0 0.0
        %430 = vmatpush1.msra.mxu0 0.0
        %431 = vmatprep.subr.mxu0 0.0
        %432 = vmatpush1.msra.mxu0 0.0
        %433 = vmatprep.subr.mxu0 0.0
        %434 = vmatpush1.msra.mxu0 0.0
        %435 = vmatprep.subr.mxu0 0.0
        %436 = vmatpush1.msra.mxu0 0.0
        %437 = vmatprep.mubr.f32.mxu0 0.0
        %438 = vmatmul.mubr.f32.gmra.mrb[0].mxu0 %v371
        %v439 = vpop.f32.mrb[0].mxu0
        %v440 = vadd.f32 %v368, %v439
        %v441 = vpop.f32.mrb[0].mxu0
        %442 = vdwg.mxu0
        %v443 = vmul.f32 %v440, 0.5
        %v444 = vmul.f32 %v443, 1.442695
        %v445 = vpow.pop %v444
        %v446 = vld [vmem:[%s232] sm:$0xff]
        %448 = vrot.lane.b32.xlu0 %v445, 112
        %v449 = vpop.permute.xlu0 %448
        %v451 = vmul.f32 %v446, %v449
        %v452 = vadd.f32 %v451, %v440
        %v453 = vlaneseq
        %v454 = vshrl.u32 %v453, 7
        %v455 = vsub.s32 2, %v454
        %v456 = vrot.slane %v285, %v455
        %vm457 = vcmask 130048
        %v459 = vsel %vm457, %v452, 0
        %461 = vmatprep.subr.mxu0 0.0
        %462 = vmatpush1.msra.mxu0 %v275
        %463 = vmatprep.subr.mxu0 0.0
        %464 = vmatpush1.msra.mxu0 %v276
        %465 = vmatprep.subr.mxu0 0.0
        %466 = vmatpush1.msra.mxu0 0.0
        %467 = vmatprep.subr.mxu0 0.0
        %468 = vmatpush1.msra.mxu0 0.0
        %469 = vmatprep.subr.mxu0 0.0
        %470 = vmatpush1.msra.mxu0 0.0
        %471 = vmatprep.subr.mxu0 0.0
        %472 = vmatpush1.msra.mxu0 0.0
        %473 = vmatprep.subr.mxu0 0.0
        %474 = vmatpush1.msra.mxu0 0.0
        %475 = vmatprep.subr.mxu0 0.0
        %476 = vmatpush1.msra.mxu0 0.0
        %477 = vmatprep.subr.mxu0 0.0
        %478 = vmatpush1.msra.mxu0 0.0
        %479 = vmatprep.subr.mxu0 0.0
        %480 = vmatpush1.msra.mxu0 0.0
        %481 = vmatprep.subr.mxu0 0.0
        %482 = vmatpush1.msra.mxu0 0.0
        %483 = vmatprep.subr.mxu0 0.0
        %484 = vmatpush1.msra.mxu0 0.0
        %485 = vmatprep.subr.mxu0 0.0
        %486 = vmatpush1.msra.mxu0 0.0
        %487 = vmatprep.subr.mxu0 0.0
        %488 = vmatpush1.msra.mxu0 0.0
        %489 = vmatprep.subr.mxu0 0.0
        %490 = vmatpush1.msra.mxu0 0.0
        %491 = vmatprep.subr.mxu0 0.0
        %492 = vmatpush1.msra.mxu0 0.0
        %493 = vmatprep.subr.mxu0 0.0
        %494 = vmatpush1.msra.mxu0 0.0
        %495 = vmatprep.subr.mxu0 0.0
        %496 = vmatpush1.msra.mxu0 0.0
        %497 = vmatprep.subr.mxu0 0.0
        %498 = vmatpush1.msra.mxu0 0.0
        %499 = vmatprep.subr.mxu0 0.0
        %500 = vmatpush1.msra.mxu0 0.0
        %501 = vmatprep.subr.mxu0 0.0
        %502 = vmatpush1.msra.mxu0 0.0
        %503 = vmatprep.subr.mxu0 0.0
        %504 = vmatpush1.msra.mxu0 0.0
        %505 = vmatprep.subr.mxu0 0.0
        %506 = vmatpush1.msra.mxu0 0.0
        %507 = vmatprep.subr.mxu0 0.0
        %508 = vmatpush1.msra.mxu0 0.0
        %509 = vmatprep.subr.mxu0 0.0
        %510 = vmatpush1.msra.mxu0 0.0
        %511 = vmatprep.subr.mxu0 0.0
        %512 = vmatpush1.msra.mxu0 0.0
        %513 = vmatprep.subr.mxu0 0.0
        %514 = vmatpush1.msra.mxu0 0.0
        %515 = vmatprep.subr.mxu0 0.0
        %516 = vmatpush1.msra.mxu0 0.0
        %517 = vmatprep.subr.mxu0 0.0
        %518 = vmatpush1.msra.mxu0 0.0
        %519 = vmatprep.subr.mxu0 0.0
        %520 = vmatpush1.msra.mxu0 0.0
        %521 = vmatprep.subr.mxu0 0.0
        %522 = vmatpush1.msra.mxu0 0.0
        %523 = vmatprep.subr.mxu0 0.0
        %524 = vmatpush1.msra.mxu0 0.0
        %525 = vmatprep.mubr.f32.mxu0 0.0
        %526 = vmatmul.mubr.f32.gmra.mrb[0].mxu0 %v459
        %v527 = vpop.f32.mrb[0].mxu0
        %v528 = vadd.f32 %v456, %v527
        %v529 = vpop.f32.mrb[0].mxu0
        %530 = vdwg.mxu0
        %v531 = vmax.f32 %v528, 0.0
        %v532 = vlaneseq
        %v533 = vshrl.u32 %v532, 7
        %v534 = vsub.s32 3, %v533
        %v535 = vrot.slane %v285, %v534
        %v537 = vsel %vm369, %v531, 0
        %539 = vmatprep.subr.mxu0 0.0
        %540 = vmatpush1.msra.mxu0 %v277
        %541 = vmatprep.subr.mxu0 0.0
        %542 = vmatpush1.msra.mxu0 %v278
        %543 = vmatprep.subr.mxu0 0.0
        %544 = vmatpush1.msra.mxu0 %v279
        %545 = vmatprep.subr.mxu0 0.0
        %546 = vmatpush1.msra.mxu0 %v280
        %547 = vmatprep.subr.mxu0 0.0
        %548 = vmatpush1.msra.mxu0 %v281
        %549 = vmatprep.subr.mxu0 0.0
        %550 = vmatpush1.msra.mxu0 %v282
        %551 = vmatprep.subr.mxu0 0.0
        %552 = vmatpush1.msra.mxu0 %v283
        %553 = vmatprep.subr.mxu0 0.0
        %554 = vmatpush1.msra.mxu0 %v284
        %555 = vmatprep.subr.mxu0 0.0
        %556 = vmatpush1.msra.mxu0 0.0
        %557 = vmatprep.subr.mxu0 0.0
        %558 = vmatpush1.msra.mxu0 0.0
        %559 = vmatprep.subr.mxu0 0.0
        %560 = vmatpush1.msra.mxu0 0.0
        %561 = vmatprep.subr.mxu0 0.0
        %562 = vmatpush1.msra.mxu0 0.0
        %563 = vmatprep.subr.mxu0 0.0
        %564 = vmatpush1.msra.mxu0 0.0
        %565 = vmatprep.subr.mxu0 0.0
        %566 = vmatpush1.msra.mxu0 0.0
        %567 = vmatprep.subr.mxu0 0.0
        %568 = vmatpush1.msra.mxu0 0.0
        %569 = vmatprep.subr.mxu0 0.0
        %570 = vmatpush1.msra.mxu0 0.0
        %571 = vmatprep.subr.mxu0 0.0
        %572 = vmatpush1.msra.mxu0 0.0
        %573 = vmatprep.subr.mxu0 0.0
        %574 = vmatpush1.msra.mxu0 0.0
        %575 = vmatprep.subr.mxu0 0.0
        %576 = vmatpush1.msra.mxu0 0.0
        %577 = vmatprep.subr.mxu0 0.0
        %578 = vmatpush1.msra.mxu0 0.0
        %579 = vmatprep.subr.mxu0 0.0
        %580 = vmatpush1.msra.mxu0 0.0
        %581 = vmatprep.subr.mxu0 0.0
        %582 = vmatpush1.msra.mxu0 0.0
        %583 = vmatprep.subr.mxu0 0.0
        %584 = vmatpush1.msra.mxu0 0.0
        %585 = vmatprep.subr.mxu0 0.0
        %586 = vmatpush1.msra.mxu0 0.0
        %587 = vmatprep.subr.mxu0 0.0
        %588 = vmatpush1.msra.mxu0 0.0
        %589 = vmatprep.subr.mxu0 0.0
        %590 = vmatpush1.msra.mxu0 0.0
        %591 = vmatprep.subr.mxu0 0.0
        %592 = vmatpush1.msra.mxu0 0.0
        %593 = vmatprep.subr.mxu0 0.0
        %594 = vmatpush1.msra.mxu0 0.0
        %595 = vmatprep.subr.mxu0 0.0
        %596 = vmatpush1.msra.mxu0 0.0
        %597 = vmatprep.subr.mxu0 0.0
        %598 = vmatpush1.msra.mxu0 0.0
        %599 = vmatprep.subr.mxu0 0.0
        %600 = vmatpush1.msra.mxu0 0.0
        %601 = vmatprep.subr.mxu0 0.0
        %602 = vmatpush1.msra.mxu0 0.0
        %603 = vmatprep.mubr.f32.mxu0 0.0
        %604 = vmatmul.mubr.f32.gmra.mrb[0].mxu0 %v537
        %v605 = vpop.f32.mrb[0].mxu0
        %v606 = vadd.f32 %v535, %v605
        %v607 = vpop.f32.mrb[0].mxu0
        %608 = vdwg.mxu0
        %v609 = vxor.u32 %v606, 2147483648
        %v610 = vmul.f32 %v609, 1.442695
        %v611 = vpow.pop %v610
        %v612 = vadd.f32 %v611, 1.0
        %v613 = vrcp.pop %v612
        %v614 = vmul.f32 1.0, %v613
        %616 = vrot.lane.b32.xlu0 %v440, 32
        %v617 = vpop.permute.xlu0 %616
        %619 = vrot.lane.b32.xlu0 %v452, 64
        %v620 = vpop.permute.xlu0 %619
        %v622 = vsel %vm290, %v614, %v617
        %vm623 = vcmask 392192
        %v624 = vsel %vm623, %v622, %v617
        %v625 = vsel %vm369, %v624, %v620
        %vm626 = vcmask 654336
        %v627 = vsel %vm626, %v625, 0.0
        %628 = vst [vmem:[%s261] sm:$0xff] %v627
        %s629 = sand.u32 %s124, 1
        %s630 = scalar_lea.sflag [#allocation4], %s629
        %s631 = sand.u32 %s124, 1
        %s632 = smul.addr %s631, 8
        %s633 = scalar_lea.vmem [#allocation8], %s632
        // Predicated region
        $region49: #{tpu_custom_call.1} parent=35 // pred_check
          %p634 = pneg %p134
        $region50: #{tpu_custom_call.1} parent=35 // pred_check_branch
          %636 = sbr.rel (%p634) target = $region52
        $region51: #{tpu_custom_call.1} parent=35 // pred_region
          %s638 = ssub.s32 128, 128
          %639 = vsyncadd %s630, %s638
          %s640 = smul.addr %s22, 128
          %s641 = scalar_lea.hbm %s4, %s640
          %s643 = sshll.u32 %s633, 4
          %s644 = int_to_ptr.vmem [resolvable:$true] %s643
          %646 = dma.vmem_to_hbm [thread:$0]  %s644, 128, %s641, %s630
        $region52: #{tpu_custom_call.1} parent=35 // pred_fallthru
          _
      $region36: #{tpu_custom_call.1} parent=5 // pred_fallthru
        _
      %p647 = scmp.le.s32.totalorder 2, %s17
      // Predicated region
      $region53: #{tpu_custom_call.1} parent=5 // pred_check
        %p648 = pneg %p647
      $region54: #{tpu_custom_call.1} parent=5 // pred_check_branch
        %650 = sbr.rel (%p648) target = $region56
      $region55: #{tpu_custom_call.1} parent=5 // pred_region
        %s651 = ssub.s32 %s17, 2
        // Predicated region
        $region57: #{tpu_custom_call.1} parent=55 // pred_check
          %p652 = pneg %p140
        $region58: #{tpu_custom_call.1} parent=55 // pred_check_branch
          %654 = sbr.rel (%p652) target = $region60
        $region59: #{tpu_custom_call.1} parent=55 // pred_region
          %s655 = sand.u32 %s125, 1
          %s656 = scalar_lea.sflag [#allocation4], %s655
          %s657 = sand.u32 %s125, 1
          %s658 = smul.addr %s657, 8
          %s659 = scalar_lea.vmem [#allocation8], %s658
          %660 = dma.done %s656, 128
        $region60: #{tpu_custom_call.1} parent=55 // pred_fallthru
          _
      $region56: #{tpu_custom_call.1} parent=5 // pred_fallthru
        _
    $region6: #{tpu_custom_call.1} parent=1 // loop_footer
      %s21 = sadd.s32 1, %s17
    $region7: #{tpu_custom_call.1} parent=1 // loop_footer_branch
      %16 = sbr.rel target = $region3
    $region8: #{tpu_custom_call.1} parent=1 // loop_exit
      _
    %661 = vsyncpa [#allocation3], 1
    %s662 = scalar_lea.sflag [#allocation3], 1
    %663 = vsyncpa %s662, 1
    %664 = vsyncpa [#allocation6], 1
    %665 = vsyncpa [#allocation4], 1
    %s666 = scalar_lea.sflag [#allocation4], 1
    %667 = vsyncpa %s666, 1

</llo_original>
